<compile_context>
chip_gen: v5e
topology: v5e:2x2
jax: 0.10.0
libtpu: 0.0.40
codegen_flags: <defaults>
</compile_context>

<pallas_src>
import jax
import jax.numpy as jnp
from jax.experimental import pallas as pl
from jax.experimental.pallas import tpu as pltpu


def _round_up(n, m):
    return ((n + m - 1) // m) * m


def _device_kind():
    try:
        return jax.devices()[0].device_kind.lower()
    except Exception:  # pragma: no cover - unusual runtimes
        return ""


def _has_bf16_vector_units(kind):
    # v6e / v7x have a bf16 VPU + EUP; v5e (and older) do not.
    return ("v6" in kind) or ("v7" in kind)


def _has_two_tensorcores(kind):
    return "v7" in kind


def _ppo_critic_kernel(x_ref, w1_ref, b1_ref, w2_ref, b2_ref, w3t_ref, b3_ref,
                       o_ref):
    compute_dtype = w1_ref.dtype   # MXU operand dtype (bf16 by default)
    act_dtype = b1_ref.dtype       # bias-add / tanh dtype (bf16 on v6e/v7x)

    # x arrives from HBM in its original dtype (f32); cast to the compute
    # dtype here, fused into the kernel, instead of a separate HBM pass.
    x = x_ref[...].astype(compute_dtype)

    # Layer 1: Linear -> Tanh (f32 MXU accumulation; activation math in
    # act_dtype: bf16 where the VPU/EUP supports it, f32 on v5e).
    h = jnp.dot(x, w1_ref[...], preferred_element_type=jnp.float32)
    h = jnp.tanh(h.astype(act_dtype) + b1_ref[...]).astype(compute_dtype)

    # Layer 2: Linear -> Tanh.
    h2 = jnp.dot(h, w2_ref[...], preferred_element_type=jnp.float32)
    h2 = jnp.tanh(h2.astype(act_dtype) + b2_ref[...]).astype(compute_dtype)

    # Head: (1, H2) x (block_b, H2)^T -> (1, block_b).  Contracting the last
    # dim of both operands gives a lane-dense row result, so the store below
    # is a full-lane vst (the wrapper reshapes back to (B, 1)).
    v = jnp.einsum("oh,bh->ob", w3t_ref[...], h2,
                   preferred_element_type=jnp.float32)
    o_ref[...] = (v + b3_ref[0, 0]).astype(o_ref.dtype)


def _pick_block_b(B, D, H1, H2, x_bytes, compute_bytes, act_bytes,
                  vmem_budget_bytes, two_tensorcores):
    """Derive the batch tile from a per-step VMEM byte budget."""
    # Resident weights/biases: constant-index blocks skip re-DMA but are still
    # double-buffered in VMEM, so charge them x2.
    fixed = (2 * compute_bytes * (D * H1 + H1 * H2 + H2)
             + 2 * act_bytes * (H1 + H2) + 2 * 4)
    # Per batch row: x tile (double-buffered) + hidden activations
    # (f32 accumulator + compute-dtype copy, generous) + output row (x2).
    per_row = 2 * x_bytes * D + (H1 + H2) * (4 + compute_bytes) + 2 * 4
    avail = max(vmem_budget_bytes - fixed, 256 * per_row)
    blk = avail // per_row

    blk = max(16, min(blk, _round_up(B, 16)))
    blk = (blk // 128) * 128 if blk >= 128 else _round_up(blk, 16)

    if two_tensorcores:
        # Both TensorCores only engage with >= 2 "parallel" grid steps, and an
        # odd count idles one core for the tail (perf-only heuristic).
        nb = pl.cdiv(B, blk)
        if nb == 1 and B >= 256:
            nb = 2
        elif nb > 1 and nb % 2 == 1:
            nb += 1
        if nb > 1:
            blk = max(16, _round_up(pl.cdiv(B, nb), 16))
            if blk >= 128:
                blk = _round_up(blk, 128)
    return blk


def ppo_critic_forward(x, params, *, block_b=None, compute_dtype=jnp.bfloat16,
                       act_dtype=None, vmem_budget_bytes=8 * 1024 * 1024):
    """PPO critic value head.  x: [B, input_dim] -> value: [B, 1] float32."""
    w1, b1, w2, b2, w3, b3 = params
    B, D = x.shape
    H1 = w1.shape[1]
    H2 = w2.shape[1]

    kind = _device_kind()
    if act_dtype is None:
        # bf16 bias-add/tanh only where the VPU/EUP natively supports it.
        act_dtype = (jnp.bfloat16 if (compute_dtype == jnp.bfloat16
                                      and _has_bf16_vector_units(kind))
                     else jnp.float32)

    if block_b is None:
        block_b = _pick_block_b(
            B, D, H1, H2,
            x_bytes=jnp.dtype(x.dtype).itemsize,
            compute_bytes=jnp.dtype(compute_dtype).itemsize,
            act_bytes=jnp.dtype(act_dtype).itemsize,
            vmem_budget_bytes=vmem_budget_bytes,
            two_tensorcores=_has_two_tensorcores(kind))
    else:
        block_b = _round_up(block_b, 16)   # bf16 sublane tile

    # Ragged batch: no jnp.pad (that would rewrite x in HBM).  Pallas handles
    # the partial last block; padded rows only produce throwaway columns in
    # the output slab which are sliced off below.
    num_blocks = pl.cdiv(B, block_b)

    # Weights are tiny; casting them in the wrapper is negligible.  x is NOT
    # cast here -- the kernel casts after the VMEM load.
    w1_c = w1.astype(compute_dtype)
    w2_c = w2.astype(compute_dtype)
    w3t = w3.astype(compute_dtype).T                  # (1, H2) for the NT head
    b1_c = b1.reshape(1, H1).astype(act_dtype)
    b2_c = b2.reshape(1, H2).astype(act_dtype)
    b3_s = b3.astype(jnp.float32).reshape(1, 1)       # scalar bias -> SMEM

    out = pl.pallas_call(
        _ppo_critic_kernel,
        out_shape=jax.ShapeDtypeStruct((num_blocks, 1, block_b), jnp.float32),
        grid_spec=pltpu.PrefetchScalarGridSpec(
            num_scalar_prefetch=0,
            grid=(num_blocks,),
            in_specs=[
                pl.BlockSpec((block_b, D), lambda i: (i, 0)),       # x tile
                pl.BlockSpec((D, H1), lambda i: (0, 0)),            # W1 (resident)
                pl.BlockSpec((1, H1), lambda i: (0, 0)),            # b1
                pl.BlockSpec((H1, H2), lambda i: (0, 0)),           # W2
                pl.BlockSpec((1, H2), lambda i: (0, 0)),            # b2
                pl.BlockSpec((1, H2), lambda i: (0, 0)),            # W3^T
                pl.BlockSpec(memory_space=pltpu.MemorySpace.SMEM),  # b3 scalar
            ],
            out_specs=pl.BlockSpec((None, 1, block_b), lambda i: (i, 0, 0)),
        ),
        compiler_params=pltpu.CompilerParams(
            dimension_semantics=("parallel",)),
    )(x, w1_c, b1_c, w2_c, b2_c, w3t, b3_s)

    # (num_blocks, 1, block_b) -> (num_blocks*block_b, 1); slice BEFORE any
    # downstream use so padded-row garbage never escapes.
    return out.reshape(num_blocks * block_b, 1)[:B]


def init_params(key, input_dim, hidden_dim):
    """Deterministic synthetic init (stands in for the 'critic' init scheme)."""
    dims = [input_dim] + list(hidden_dim) + [1]
    params = []
    for i in range(len(dims) - 1):
        key, wk = jax.random.split(key)
        fan_in = dims[i]
        scale = 1.0 / jnp.sqrt(jnp.float32(fan_in))
        w = jax.random.uniform(wk, (dims[i], dims[i + 1]), jnp.float32,
                               minval=-scale, maxval=scale)
        b = jnp.zeros((1, dims[i + 1]), jnp.float32)
        params += [w, b]
    return tuple(params)


def reference_forward(x, params):
    w1, b1, w2, b2, w3, b3 = params
    h = jnp.tanh(x @ w1 + b1)
    h = jnp.tanh(h @ w2 + b2)
    return h @ w3 + b3


if __name__ == "__main__":
    key = jax.random.PRNGKey(0)
    input_dim = 32
    hidden_dim = [64, 64]

    kx, kp = jax.random.split(key)
    params = init_params(kp, input_dim, hidden_dim)

    # bf16 weights/activations on the MXU/VPU path -> compare to the f32
    # reference with a loose-but-meaningful tolerance.
    ATOL, RTOL = 3e-2, 2e-2

    # 1) Small batch, auto-sized tile (single grid step).
    x = jax.random.normal(kx, (8, input_dim), jnp.float32)
    value = jax.block_until_ready(ppo_critic_forward(x, params))
    ref = reference_forward(x, params)
    assert value.shape == (8, 1)
    assert jnp.allclose(value, ref, atol=ATOL, rtol=RTOL), (
        float(jnp.max(jnp.abs(value - ref))))

    # 2) Ragged batch with a partial last block (no padding pass in HBM).
    x2 = jax.random.normal(jax.random.PRNGKey(1), (13, input_dim), jnp.float32)
    v2 = jax.block_until_ready(ppo_critic_forward(x2, params, block_b=16))
    r2 = reference_forward(x2, params)
    assert v2.shape == (13, 1)
    assert jnp.allclose(v2, r2, atol=ATOL, rtol=RTOL), (
        float(jnp.max(jnp.abs(v2 - r2))))

    # 3) Multi-block grid: exercises per-tile index maps and the lane-dense
    #    multi-block output reshape path.
    x3 = jax.random.normal(jax.random.PRNGKey(2), (48, input_dim), jnp.float32)
    v3 = jax.block_until_ready(ppo_critic_forward(x3, params, block_b=16))
    r3 = reference_forward(x3, params)
    assert v3.shape == (48, 1)
    assert jnp.allclose(v3, r3, atol=ATOL, rtol=RTOL), (
        float(jnp.max(jnp.abs(v3 - r3))))

    print("KERNEL_OK")
</pallas_src>

<mosaic_0001>
module attributes {stable_mosaic.version = 11 : i64} {
  func.func @_ppo_critic_kernel(%arg0: i32, %arg1: memref<16x32xf32, #tpu.memory_space<vmem>>, %arg2: memref<32x64xbf16, #tpu.memory_space<vmem>>, %arg3: memref<1x64xf32, #tpu.memory_space<vmem>>, %arg4: memref<64x64xbf16, #tpu.memory_space<vmem>>, %arg5: memref<1x64xf32, #tpu.memory_space<vmem>>, %arg6: memref<1x64xbf16, #tpu.memory_space<vmem>>, %arg7: memref<1x1xf32, #tpu.memory_space<smem>>, %arg8: memref<1x1x16xf32, #tpu.memory_space<vmem>>) attributes {dimension_semantics = [#tpu.dimension_semantics<parallel>], iteration_bounds = array<i64: 1>, scalar_prefetch = 0 : i64, scratch_operands = 0 : i64, tpu.core_type = #tpu.core_type<tc>, window_params = [{transform_indices = @transform_0, window_bounds = array<i64: 16, 32>}, {pipeline_mode = #tpu.pipeline_mode<synchronous>, transform_indices = @transform_1, window_bounds = array<i64: 32, 64>}, {pipeline_mode = #tpu.pipeline_mode<synchronous>, transform_indices = @transform_2, window_bounds = array<i64: 1, 64>}, {pipeline_mode = #tpu.pipeline_mode<synchronous>, transform_indices = @transform_3, window_bounds = array<i64: 64, 64>}, {pipeline_mode = #tpu.pipeline_mode<synchronous>, transform_indices = @transform_4, window_bounds = array<i64: 1, 64>}, {pipeline_mode = #tpu.pipeline_mode<synchronous>, transform_indices = @transform_5, window_bounds = array<i64: 1, 64>}, {transform_indices = @transform_6, window_bounds = array<i64: 1, 1>}, {transform_indices = @transform_7, window_bounds = array<i64: 1, 1, 16>}]} {
    %c0 = arith.constant 0 : index
    %c0_0 = arith.constant 0 : index
    %0 = vector.load %arg1[%c0, %c0_0] : memref<16x32xf32, #tpu.memory_space<vmem>>, vector<16x32xf32>
    %1 = arith.truncf %0 : vector<16x32xf32> to vector<16x32xbf16>
    %c0_1 = arith.constant 0 : index
    %c0_2 = arith.constant 0 : index
    %2 = vector.load %arg2[%c0_1, %c0_2] : memref<32x64xbf16, #tpu.memory_space<vmem>>, vector<32x64xbf16>
    %cst = arith.constant dense<0.000000e+00> : vector<16x64xf32>
    %3 = tpu.matmul %1, %2, %cst {dimension_numbers = #tpu.dot_dimension_numbers<[1], [0], [0], [1], [0, 0, 1, 1], [], []>} : vector<16x32xbf16>, vector<32x64xbf16>, vector<16x64xf32> -> vector<16x64xf32>
    %c0_3 = arith.constant 0 : index
    %c0_4 = arith.constant 0 : index
    %4 = vector.load %arg3[%c0_3, %c0_4] : memref<1x64xf32, #tpu.memory_space<vmem>>, vector<1x64xf32>
    %5 = vector.broadcast %4 : vector<1x64xf32> to vector<16x64xf32>
    %6 = arith.addf %3, %5 : vector<16x64xf32>
    %7 = math.tanh %6 : vector<16x64xf32>
    %8 = arith.truncf %7 : vector<16x64xf32> to vector<16x64xbf16>
    %c0_5 = arith.constant 0 : index
    %c0_6 = arith.constant 0 : index
    %9 = vector.load %arg4[%c0_5, %c0_6] : memref<64x64xbf16, #tpu.memory_space<vmem>>, vector<64x64xbf16>
    %cst_7 = arith.constant dense<0.000000e+00> : vector<16x64xf32>
    %10 = tpu.matmul %8, %9, %cst_7 {dimension_numbers = #tpu.dot_dimension_numbers<[1], [0], [0], [1], [0, 0, 1, 1], [], []>} : vector<16x64xbf16>, vector<64x64xbf16>, vector<16x64xf32> -> vector<16x64xf32>
    %c0_8 = arith.constant 0 : index
    %c0_9 = arith.constant 0 : index
    %11 = vector.load %arg5[%c0_8, %c0_9] : memref<1x64xf32, #tpu.memory_space<vmem>>, vector<1x64xf32>
    %12 = vector.broadcast %11 : vector<1x64xf32> to vector<16x64xf32>
    %13 = arith.addf %10, %12 : vector<16x64xf32>
    %14 = math.tanh %13 : vector<16x64xf32>
    %15 = arith.truncf %14 : vector<16x64xf32> to vector<16x64xbf16>
    %c0_10 = arith.constant 0 : index
    %c0_11 = arith.constant 0 : index
    %16 = vector.load %arg6[%c0_10, %c0_11] : memref<1x64xbf16, #tpu.memory_space<vmem>>, vector<1x64xbf16>
    "tpu.trace_start"() <{level = 10 : i32, message = "oh,bh->ob"}> : () -> ()
    %cst_12 = arith.constant dense<0.000000e+00> : vector<1x16xf32>
    %17 = tpu.matmul %16, %15, %cst_12 {dimension_numbers = #tpu.dot_dimension_numbers<[1], [1], [0], [0], [0, 0, 1, 0], [], []>} : vector<1x64xbf16>, vector<16x64xbf16>, vector<1x16xf32> -> vector<1x16xf32>
    "tpu.trace_stop"() : () -> ()
    %c0_13 = arith.constant 0 : index
    %c0_14 = arith.constant 0 : index
    %18 = memref.load %arg7[%c0_13, %c0_14] : memref<1x1xf32, #tpu.memory_space<smem>>
    %19 = vector.broadcast %18 : f32 to vector<1x16xf32>
    %20 = arith.addf %17, %19 : vector<1x16xf32>
    %c0_15 = arith.constant 0 : index
    %c0_16 = arith.constant 0 : index
    %c0_17 = arith.constant 0 : index
    %21 = vector.load %arg8[%c0_15, %c0_16, %c0_17] : memref<1x1x16xf32, #tpu.memory_space<vmem>>, vector<1x1x16xf32>
    %22 = vector.shape_cast %21 : vector<1x1x16xf32> to vector<1x16xf32>
    %23 = vector.shape_cast %20 : vector<1x16xf32> to vector<1x1x16xf32>
    tpu.vector_store %arg8[%c0_15, %c0_16, %c0_17], %23 {strides = array<i32>} : memref<1x1x16xf32, #tpu.memory_space<vmem>>, vector<1x1x16xf32>,
    return
  }
  func.func @transform_0(%arg0: i32) -> (i32, i32) {
    %c0_i32 = arith.constant 0 : i32
    %c0_i32_0 = arith.constant 0 : i32
    return %arg0, %c0_i32 : i32, i32
  }
  func.func @transform_1(%arg0: i32) -> (i32, i32) {
    %c0_i32 = arith.constant 0 : i32
    %c0_i32_0 = arith.constant 0 : i32
    %c0_i32_1 = arith.constant 0 : i32
    return %c0_i32, %c0_i32_0 : i32, i32
  }
  func.func @transform_2(%arg0: i32) -> (i32, i32) {
    %c0_i32 = arith.constant 0 : i32
    %c0_i32_0 = arith.constant 0 : i32
    %c0_i32_1 = arith.constant 0 : i32
    return %c0_i32, %c0_i32_0 : i32, i32
  }
  func.func @transform_3(%arg0: i32) -> (i32, i32) {
    %c0_i32 = arith.constant 0 : i32
    %c0_i32_0 = arith.constant 0 : i32
    %c0_i32_1 = arith.constant 0 : i32
    return %c0_i32, %c0_i32_0 : i32, i32
  }
  func.func @transform_4(%arg0: i32) -> (i32, i32) {
    %c0_i32 = arith.constant 0 : i32
    %c0_i32_0 = arith.constant 0 : i32
    %c0_i32_1 = arith.constant 0 : i32
    return %c0_i32, %c0_i32_0 : i32, i32
  }
  func.func @transform_5(%arg0: i32) -> (i32, i32) {
    %c0_i32 = arith.constant 0 : i32
    %c0_i32_0 = arith.constant 0 : i32
    %c0_i32_1 = arith.constant 0 : i32
    return %c0_i32, %c0_i32_0 : i32, i32
  }
  func.func @transform_6(%arg0: i32) -> (i32, i32) {
    %c0_i32 = arith.constant 0 : i32
    %c0_i32_0 = arith.constant 0 : i32
    %c0_i32_1 = arith.constant 0 : i32
    return %c0_i32, %c0_i32_0 : i32, i32
  }
  func.func @transform_7(%arg0: i32) -> (i32, i32, i32) {
    %c0_i32 = arith.constant 0 : i32
    %c0_i32_0 = arith.constant 0 : i32
    %c0_i32_1 = arith.constant 0 : i32
    return %arg0, %c0_i32, %c0_i32_0 : i32, i32, i32
  }
}

</mosaic_0001>

<llo_original>
// kernel: tpu_custom_call.1
$region0: #{tpu_custom_call.1}
  #allocation0 [shape = 'u32[]', space=smem, size = 0x4, offset = 0x4, fixed_abs, tag = 'smem constant byte address 0x4 - core index']
  #allocation1 [shape = 'u32[72,128]{1,0:T(1,128)}', space=vmem, size = 0x9000, scoped, tag = 'internal scratch']
  #allocation2 [shape = 'f32[1,1]{1,0:T(1,128)S(6)}', space=smem, size = 0x200, scoped, tag = 'scoped memory for tpu_custom_call.1']
  %s0 = inlined_call_operand.hbm [shape: f32[8,32], index: 0, kind: input, shape index: {}]
  %s1 = inlined_call_operand.hbm [shape: bf16[32,64], index: 1, kind: input, shape index: {}]
  %s2 = inlined_call_operand.vmem [shape: f32[1,64], index: 2, kind: input, shape index: {}]
  %s3 = inlined_call_operand.hbm [shape: bf16[64,64], index: 3, kind: input, shape index: {}]
  %s4 = inlined_call_operand.vmem [shape: f32[1,64], index: 4, kind: input, shape index: {}]
  %s5 = inlined_call_operand.vmem [shape: bf16[1,64], index: 5, kind: input, shape index: {}]
  %s6 = inlined_call_operand.<no memory space> [shape: f32[1,1], index: 6, kind: input, shape index: {}]
  %s7 = inlined_call_operand.hbm [shape: f32[1,1,16], index: 7, kind: output, shape index: {}]
  %s8 = sld [smem:[#allocation0]]
  $region50: #{tpu_custom_call.1} parent=0
    _
  %s10 = ssub.s32 1, %s8
  %s11 = scalar_select 0, %s10, %s8
  %12 = sst [smem:[#allocation2]] %s6
  $region1: #{tpu_custom_call.1} parent=0
    #allocation3 [shape = 'u8[8192]{0}', space=vmem, size = 0x2000, scoped, tag = 'input window, operand 0, single buffered']
    #allocation4 [shape = 's32[1]{0}', space=sflag, size = 0x4, scoped, tag = 'scoped memory for tpu_custom_call.1']
    #allocation5 [shape = 's32[1]{0}', space=sflag, size = 0x4, scoped, tag = 'scoped memory for tpu_custom_call.1']
    #allocation6 [shape = 'u8[8192]{0}', space=vmem, size = 0x2000, scoped, tag = 'input window, operand 1, single buffered']
    #allocation7 [shape = 's32[1]{0}', space=sflag, size = 0x4, scoped, tag = 'scoped memory for tpu_custom_call.1']
    #allocation8 [shape = 'u8[16384]{0}', space=vmem, size = 0x4000, scoped, tag = 'input window, operand 3, single buffered']
    #allocation9 [shape = 'u8[512]{0}', space=vmem, size = 0x400, scoped, tag = 'output window, operand 0, single buffered']
    %13 = vsyncpa [#allocation4], 0
    %14 = vsyncpa [#allocation7], 0
    %15 = vsyncpa [#allocation5], 0
    // Predicated region
    $region2: #{tpu_custom_call.1} parent=1 // pred_check
      _
    $region3: #{tpu_custom_call.1} parent=1 // pred_check_branch
      %17 = sbr.rel (0) target = $region5
    $region4: #{tpu_custom_call.1} parent=1 // pred_region
      %19 = vsyncadd [#allocation4], 128
      %s20 = sshll.u32 %s0, 4
      %s21 = int_to_ptr.hbm [resolvable:$true] %s20
      %s22 = sshll.u32 [#allocation3], 4
      %s23 = int_to_ptr.vmem [resolvable:$true] %s22
      %28 = dma.hbm_to_vmem [thread:$0]  %s21, 128, %s23, [#allocation4], 128, 128, 8
    $region5: #{tpu_custom_call.1} parent=1 // pred_fallthru
      _
    // Predicated region
    $region6: #{tpu_custom_call.1} parent=1 // pred_check
      _
    $region7: #{tpu_custom_call.1} parent=1 // pred_check_branch
      %30 = sbr.rel (0) target = $region9
    $region8: #{tpu_custom_call.1} parent=1 // pred_region
      %32 = vsyncadd [#allocation7], 0
      %s33 = sshll.u32 %s1, 4
      %s34 = int_to_ptr.hbm [resolvable:$true] %s33
      %s35 = sshll.u32 [#allocation6], 4
      %s36 = int_to_ptr.vmem [resolvable:$true] %s35
      %41 = dma.hbm_to_vmem [thread:$0]  %s34, 256, %s36, [#allocation7], 64, 64, 4
    $region9: #{tpu_custom_call.1} parent=1 // pred_fallthru
      _
    // Predicated region
    $region10: #{tpu_custom_call.1} parent=1 // pred_check
      _
    $region11: #{tpu_custom_call.1} parent=1 // pred_check_branch
      %43 = sbr.rel (0) target = $region13
    $region12: #{tpu_custom_call.1} parent=1 // pred_region
      _
    $region13: #{tpu_custom_call.1} parent=1 // pred_fallthru
      _
    // Predicated region
    $region14: #{tpu_custom_call.1} parent=1 // pred_check
      _
    $region15: #{tpu_custom_call.1} parent=1 // pred_check_branch
      %45 = sbr.rel (0) target = $region17
    $region16: #{tpu_custom_call.1} parent=1 // pred_region
      %47 = vsyncadd [#allocation7], 0
      %s48 = sshll.u32 %s3, 4
      %s49 = int_to_ptr.hbm [resolvable:$true] %s48
      %s50 = sshll.u32 [#allocation8], 4
      %s51 = int_to_ptr.vmem [resolvable:$true] %s50
      %56 = dma.hbm_to_vmem [thread:$0]  %s49, 512, %s51, [#allocation7], 64, 64, 4
    $region17: #{tpu_custom_call.1} parent=1 // pred_fallthru
      _
    // Predicated region
    $region18: #{tpu_custom_call.1} parent=1 // pred_check
      _
    $region19: #{tpu_custom_call.1} parent=1 // pred_check_branch
      %58 = sbr.rel (0) target = $region21
    $region20: #{tpu_custom_call.1} parent=1 // pred_region
      _
    $region21: #{tpu_custom_call.1} parent=1 // pred_fallthru
      _
    // Predicated region
    $region22: #{tpu_custom_call.1} parent=1 // pred_check
      _
    $region23: #{tpu_custom_call.1} parent=1 // pred_check_branch
      %60 = sbr.rel (0) target = $region25
    $region24: #{tpu_custom_call.1} parent=1 // pred_region
      _
    $region25: #{tpu_custom_call.1} parent=1 // pred_fallthru
      _
    // Predicated region
    $region26: #{tpu_custom_call.1} parent=1 // pred_check
      _
    $region27: #{tpu_custom_call.1} parent=1 // pred_check_branch
      %62 = sbr.rel (0) target = $region29
    $region28: #{tpu_custom_call.1} parent=1 // pred_region
      _
    $region29: #{tpu_custom_call.1} parent=1 // pred_fallthru
      _
    // Predicated region
    $region30: #{tpu_custom_call.1} parent=1 // pred_check
      _
    $region31: #{tpu_custom_call.1} parent=1 // pred_check_branch
      %64 = sbr.rel (0) target = $region33
    $region32: #{tpu_custom_call.1} parent=1 // pred_region
      %66 = dma.done [#allocation4], 256
    $region33: #{tpu_custom_call.1} parent=1 // pred_fallthru
      _
    // Predicated region
    $region34: #{tpu_custom_call.1} parent=1 // pred_check
      _
    $region35: #{tpu_custom_call.1} parent=1 // pred_check_branch
      %68 = sbr.rel (0) target = $region37
    $region36: #{tpu_custom_call.1} parent=1 // pred_region
      %70 = dma.done [#allocation7], 256
    $region37: #{tpu_custom_call.1} parent=1 // pred_fallthru
      _
    // Predicated region
    $region38: #{tpu_custom_call.1} parent=1 // pred_check
      _
    $region39: #{tpu_custom_call.1} parent=1 // pred_check_branch
      %72 = sbr.rel (0) target = $region41
    $region40: #{tpu_custom_call.1} parent=1 // pred_region
      %74 = dma.done [#allocation7], 512
    $region41: #{tpu_custom_call.1} parent=1 // pred_fallthru
      _
    %v76 = vld [vmem:[#allocation3] sm:$0xff]
    %v77 = vld [vmem:[#allocation3 + $0x8] sm:$0xff]
    %v78 = vpack.c.bf16 %v77, %v76
    %v79 = vld [vmem:[#allocation6] sm:$0xf]
    %v80 = vld [vmem:[#allocation6 + $0x4] sm:$0xf]
    %v81 = vld [vmem:[#allocation6 + $0x8] sm:$0xf]
    %v82 = vld [vmem:[#allocation6 + $0xc] sm:$0xf]
    %v83 = vld [vmem:[%s2] sm:$0x1]
    %v85 = vperm.slane %v83, 0
    %v91 = vunpack.c.l.b16 %v79
    %v92 = vunpack.c.l.b16 %v80
    %v93 = vunpack.c.l.b16 %v81
    %v94 = vunpack.c.l.b16 %v82
    %v95 = vpack.c.b16 %v92, %v91
    %v96 = vpack.c.b16 %v94, %v93
    %vm99 = vcmask 261120
    %v101 = vsel %vm99, %v78, 0
    %103 = vmatpush.bf16.msra.mxu0 0
    %104 = vmatpush.bf16.msra.mxu0 0
    %105 = vmatpush.bf16.msra.mxu0 0
    %106 = vmatpush.bf16.msra.mxu0 0
    %107 = vmatpush.bf16.msra.mxu0 0
    %108 = vmatpush.bf16.msra.mxu0 0
    %109 = vmatpush.bf16.msra.mxu0 %v96
    %110 = vmatpush.bf16.msra.mxu0 %v95
    %111 = vmatmul.bf16.gmra.mxu0 %v101
    %v112 = vpop.f32.mrf.mxu0
    %v113 = vadd.f32 %v85, %v112
    %v114 = vpop.f32.mrf.mxu0
    %v115 = vadd.f32 %v85, %v114
    %116 = vdwg.mxu0
    %v117 = vtanh.pop %v113
    %v118 = vtanh.pop %v115
    %v119 = vpack.c.bf16 %v118, %v117
    %v120 = vld [vmem:[#allocation8] sm:$0xf]
    %v121 = vld [vmem:[#allocation8 + $0x4] sm:$0xf]
    %v122 = vld [vmem:[#allocation8 + $0x8] sm:$0xf]
    %v123 = vld [vmem:[#allocation8 + $0xc] sm:$0xf]
    %v124 = vld [vmem:[#allocation8 + $0x10] sm:$0xf]
    %v125 = vld [vmem:[#allocation8 + $0x14] sm:$0xf]
    %v126 = vld [vmem:[#allocation8 + $0x18] sm:$0xf]
    %v127 = vld [vmem:[#allocation8 + $0x1c] sm:$0xf]
    %v128 = vld [vmem:[%s4] sm:$0x1]
    %v130 = vperm.slane %v128, 0
    %v140 = vunpack.c.l.b16 %v120
    %v141 = vunpack.c.l.b16 %v121
    %v142 = vunpack.c.l.b16 %v122
    %v143 = vunpack.c.l.b16 %v123
    %v144 = vunpack.c.l.b16 %v124
    %v145 = vunpack.c.l.b16 %v125
    %v146 = vunpack.c.l.b16 %v126
    %v147 = vunpack.c.l.b16 %v127
    %v148 = vpack.c.b16 %v141, %v140
    %v149 = vpack.c.b16 %v143, %v142
    %v150 = vpack.c.b16 %v145, %v144
    %v151 = vpack.c.b16 %v147, %v146
    %vm156 = vcmask 523264
    %v158 = vsel %vm156, %v119, 0
    %160 = vmatpush.bf16.msra.mxu0 0
    %161 = vmatpush.bf16.msra.mxu0 0
    %162 = vmatpush.bf16.msra.mxu0 0
    %163 = vmatpush.bf16.msra.mxu0 0
    %164 = vmatpush.bf16.msra.mxu0 %v151
    %165 = vmatpush.bf16.msra.mxu0 %v150
    %166 = vmatpush.bf16.msra.mxu0 %v149
    %167 = vmatpush.bf16.msra.mxu0 %v148
    %168 = vmatmul.bf16.gmra.mxu0 %v158
    %v169 = vpop.f32.mrf.mxu0
    %v170 = vadd.f32 %v130, %v169
    %v171 = vpop.f32.mrf.mxu0
    %v172 = vadd.f32 %v130, %v171
    %173 = vdwg.mxu0
    %v174 = vtanh.pop %v170
    %v175 = vtanh.pop %v172
    %v176 = vpack.c.bf16 %v175, %v174
    %v177 = vld [vmem:[%s5] sm:$0x1]
    %s178 = sld [smem:[#allocation2]]
    %v179 = vstv %s178
    %v181 = vsel %vm156, %v177, 0
    %v184 = vsel %vm156, %v176, 0
    %186 = vmatpush.bf16.xpose.msra.mxu0 0
    %187 = vmatpush.bf16.xpose.msra.mxu0 0
    %188 = vmatpush.bf16.xpose.msra.mxu0 0
    %189 = vmatpush.bf16.xpose.msra.mxu0 0
    %190 = vmatpush.bf16.xpose.msra.mxu0 0
    %191 = vmatpush.bf16.xpose.msra.mxu0 0
    %192 = vmatpush.bf16.xpose.msra.mxu0 0
    %193 = vmatpush.bf16.xpose.msra.mxu0 %v184
    %194 = vmatmul.bf16.gmra.mxu0 %v181
    %v195 = vpop.f32.mrf.mxu0
    %v196 = vadd.f32 %v179, %v195
    %v197 = vpop.f32.mrf.mxu0
    %198 = vdwg.mxu0
    %vm199 = vcmask 122880
    %200 = vst.msk [vmem:[#allocation9] sm:$0x1] %vm199, %v196
    // Predicated region
    $region42: #{tpu_custom_call.1} parent=1 // pred_check
      _
    $region43: #{tpu_custom_call.1} parent=1 // pred_check_branch
      %202 = sbr.rel (0) target = $region45
    $region44: #{tpu_custom_call.1} parent=1 // pred_region
      %204 = vsyncadd [#allocation5], 0
      %s206 = sshll.u32 [#allocation9], 4
      %s207 = int_to_ptr.vmem [resolvable:$true] %s206
      %s208 = sshll.u32 %s7, 4
      %s209 = int_to_ptr.hbm [resolvable:$true] %s208
      %211 = dma.vmem_to_hbm [thread:$0]  %s207, 16, %s209, [#allocation5]
    $region45: #{tpu_custom_call.1} parent=1 // pred_fallthru
      _
    // Predicated region
    $region46: #{tpu_custom_call.1} parent=1 // pred_check
      _
    $region47: #{tpu_custom_call.1} parent=1 // pred_check_branch
      %213 = sbr.rel (0) target = $region49
    $region48: #{tpu_custom_call.1} parent=1 // pred_region
      %215 = dma.done [#allocation5], 16
    $region49: #{tpu_custom_call.1} parent=1 // pred_fallthru
      _
    %216 = vsyncpa [#allocation4], 1
    %217 = vsyncpa [#allocation7], 1
    %218 = vsyncpa [#allocation5], 1

</llo_original>
